<compile_context>
chip_gen: v5e
topology: v5e:2x2
jax: 0.10.0
libtpu: 0.0.40
codegen_flags: <defaults>
</compile_context>

<pallas_src>
import functools

import numpy as np
import jax
import jax.numpy as jnp
from jax.experimental import pallas as pl
from jax.experimental.pallas import tpu as pltpu


def _round_up(x, m):
    return ((x + m - 1) // m) * m


def _merged_basis(n_fft, win_length, normalized, f_pad, dtype):
    """[win*cos | -win*sin] DFT basis with the (centered, periodic) Hann window
    folded in. Frequency axis zero-padded to f_pad lanes per half."""
    F = n_fft // 2 + 1
    n = np.arange(n_fft, dtype=np.float64)[:, None]
    f = np.arange(F, dtype=np.float64)[None, :]
    ang = 2.0 * np.pi * n * f / n_fft
    cos_b = np.cos(ang)
    sin_b = np.sin(ang)
    # torch.hann_window default (periodic=True), centered zero-pad like torch.stft
    win = 0.5 - 0.5 * np.cos(2.0 * np.pi * np.arange(win_length, dtype=np.float64) / win_length)
    wfull = np.zeros((n_fft,), np.float64)
    left = (n_fft - win_length) // 2
    wfull[left:left + win_length] = win
    basis = np.zeros((n_fft, 2 * f_pad), np.float64)
    basis[:, :F] = wfull[:, None] * cos_b
    basis[:, f_pad:f_pad + F] = -(wfull[:, None] * sin_b)
    if normalized:
        basis /= np.sqrt(n_fft)
    return jnp.asarray(basis.astype(np.float32)).astype(dtype)


# ---------------------------------------------------------------------------
# Fast path: hop | n_fft. x stays in HBM as hop-sized chunks; each grid step
# DMAs the contiguous chunk span it needs and does r shifted matmuls.
# ---------------------------------------------------------------------------
def _stft_chunk_kernel(x_rows_hbm, basis_ref, out_ref, chunk_buf, sem,
                       *, chunks_per_batch):
    # x_rows_hbm : (B*C, hop) float HBM ref (pl.ANY)
    # basis_ref  : (r, hop, 2*F_pad) VMEM, grid-invariant
    # out_ref    : (1, tT, 2*F_pad)
    # chunk_buf  : (tT + r - 1, hop) VMEM scratch
    b = pl.program_id(0)
    j = pl.program_id(1)
    tT = out_ref.shape[1]
    r = basis_ref.shape[0]
    nrows = tT + r - 1
    row_start = b * chunks_per_batch + j * tT          # multiple of 8 by construction
    cp = pltpu.make_async_copy(
        x_rows_hbm.at[pl.ds(row_start, nrows), :], chunk_buf, sem.at[0])
    cp.start()
    cp.wait()

    cb = chunk_buf[...]                                 # (tT + r - 1, hop)
    acc = jnp.zeros((tT, out_ref.shape[2]), jnp.float32)
    for c in range(r):                                  # static unroll, r = n_fft // hop
        acc = acc + jnp.dot(cb[c:c + tT, :], basis_ref[c],
                            preferred_element_type=jnp.float32)
    out_ref[0] = acc.astype(out_ref.dtype)


# ---------------------------------------------------------------------------
# Fallback path: materialized frames, single lane-dense matmul per tile.
# ---------------------------------------------------------------------------
def _stft_frames_kernel(frames_ref, basis_ref, out_ref):
    out_ref[0] = jnp.dot(frames_ref[0], basis_ref[...],
                         preferred_element_type=jnp.float32).astype(out_ref.dtype)


def stft_module_forward(x, n_fft, hop_length, win_length, center=True,
                        normalized=False, mode='real_imag', frame_tile=256,
                        compute_dtype=jnp.float32):
    """Pallas implementation of STFT_module.forward.

    x: (B, L) float32 waveform.
    returns: (B, 2, T, F) float32, F = n_fft//2 + 1, T = 1 + L//hop (center).
    compute_dtype: set to jnp.bfloat16 on v6e/v7x for faster MXU / smaller VMEM
                   (f32 accumulation is kept); default f32 for exactness.
    """
    assert mode in ('real_imag', 'mag_pha')
    B, L = x.shape
    F = n_fft // 2 + 1
    F_pad = _round_up(F, 128)
    lanes = 2 * F_pad

    basis = _merged_basis(n_fft, win_length, normalized, F_pad, compute_dtype)

    # center padding (torch.stft default pad_mode='reflect'); requires L > n_fft//2
    if center:
        pad = n_fft // 2
        x_pad = jnp.pad(x, ((0, 0), (pad, pad)), mode='reflect')
    else:
        x_pad = x
    Lp = x_pad.shape[1]
    T = 1 + (Lp - n_fft) // hop_length

    # T-tiling (multiple of 8 sublanes)
    tT = _round_up(min(frame_tile, _round_up(T, 8)), 8)
    num_tiles = -(-T // tT)
    Tpad = num_tiles * tT

    dsize = jnp.dtype(compute_dtype).itemsize
    use_chunk = (n_fft % hop_length == 0) and (n_fft // hop_length <= 64)

    if use_chunk:
        r = n_fft // hop_length
        hop = hop_length
        # enough hop-chunks for every padded frame; rounded to 8 so every DMA
        # row offset is sublane-aligned
        C = _round_up(max(Tpad + r - 1, -(-Lp // hop)), 8)
        x_ext = jnp.pad(x_pad, ((0, 0), (0, C * hop - Lp))).astype(compute_dtype)
        x_rows = x_ext.reshape(B * C, hop)              # (B*C, hop), stays in HBM
        basis_r = basis.reshape(r, hop, lanes)

        in_tile = (tT + r - 1) * max(hop, 128) * dsize
        vmem_need = 2 * basis_r.size * dsize + 2 * tT * lanes * 4 + 2 * in_tile
        kernel = functools.partial(_stft_chunk_kernel, chunks_per_batch=C)
        out = pl.pallas_call(
            kernel,
            out_shape=jax.ShapeDtypeStruct((B, Tpad, lanes), jnp.float32),
            grid_spec=pltpu.PrefetchScalarGridSpec(
                num_scalar_prefetch=0,
                grid=(B, num_tiles),
                in_specs=[
                    pl.BlockSpec(memory_space=pl.ANY),                      # raw samples
                    pl.BlockSpec((r, hop, lanes), lambda b, j: (0, 0, 0)),  # basis
                ],
                out_specs=pl.BlockSpec((1, tT, lanes), lambda b, j: (b, j, 0)),
                scratch_shapes=[
                    pltpu.VMEM((tT + r - 1, hop), compute_dtype),
                    pltpu.SemaphoreType.DMA((1,)),
                ]),
            compiler_params=pltpu.CompilerParams(
                dimension_semantics=("parallel", "parallel"),
                vmem_limit_bytes=int(min(max(vmem_need + (4 << 20), 32 << 20), 56 << 20))),
        )(x_rows, basis_r)
    else:
        # TODO(synk): general hop (hop does not divide n_fft) still materializes
        # overlapping frames in HBM; only the matmul side is optimized here.
        starts = jnp.arange(T) * hop_length
        idx = starts[:, None] + jnp.arange(n_fft)[None, :]
        frames = x_pad[:, idx].astype(compute_dtype)                  # (B, T, n_fft)
        frames = jnp.pad(frames, ((0, 0), (0, Tpad - T), (0, 0)))
        vmem_need = 2 * basis.size * dsize + 2 * tT * lanes * 4 + 2 * tT * n_fft * dsize
        out = pl.pallas_call(
            _stft_frames_kernel,
            out_shape=jax.ShapeDtypeStruct((B, Tpad, lanes), jnp.float32),
            grid_spec=pltpu.PrefetchScalarGridSpec(
                num_scalar_prefetch=0,
                grid=(B, num_tiles),
                in_specs=[
                    pl.BlockSpec((1, tT, n_fft), lambda b, j: (b, j, 0)),
                    pl.BlockSpec((n_fft, lanes), lambda b, j: (0, 0)),
                ],
                out_specs=pl.BlockSpec((1, tT, lanes), lambda b, j: (b, j, 0)),
            ),
            compiler_params=pltpu.CompilerParams(
                dimension_semantics=("parallel", "parallel"),
                vmem_limit_bytes=int(min(max(vmem_need + (4 << 20), 32 << 20), 56 << 20))),
        )(frames, basis)

    # slice off T padding and the zero frequency-padding columns; permute to (B,2,T,F)
    out = out[:, :T, :]
    real = out[:, :, :F]
    imag = out[:, :, F_pad:F_pad + F]
    spec = jnp.stack([real, imag], axis=1)               # (B, 2, T, F)
    if mode == 'real_imag':
        return spec
    mag = jnp.sqrt(spec[:, 0] ** 2 + spec[:, 1] ** 2)
    pha = jnp.arctan2(spec[:, 1], spec[:, 0])
    return jnp.stack([mag, pha], axis=1)


def _reference_jnp(x, n_fft, hop_length, win_length):
    # pure-JAX reference (same math, no Pallas) for a sanity check
    F = n_fft // 2 + 1
    n = jnp.arange(win_length, dtype=jnp.float32)
    win = 0.5 - 0.5 * jnp.cos(2.0 * jnp.pi * n / win_length)
    left = (n_fft - win_length) // 2
    win_full = jnp.zeros((n_fft,), jnp.float32).at[left:left + win_length].set(win)
    pad = n_fft // 2
    x_pad = jnp.pad(x, ((0, 0), (pad, pad)), mode='reflect')
    T = 1 + (x_pad.shape[1] - n_fft) // hop_length
    starts = jnp.arange(T) * hop_length
    idx = starts[:, None] + jnp.arange(n_fft)[None, :]
    frames = x_pad[:, idx] * win_full[None, None, :]
    spec = jnp.fft.rfft(frames, n=n_fft, axis=-1)        # (B, T, F)
    return jnp.stack([jnp.real(spec), jnp.imag(spec)], axis=1).astype(jnp.float32)


if __name__ == "__main__":
    key = jax.random.PRNGKey(0)

    # Config 1: hop | n_fft -> fast chunk/DMA path (no frame materialization).
    B, L = 2, 64
    n_fft, hop_length, win_length = 16, 4, 16
    x = jax.random.normal(key, (B, L), dtype=jnp.float32)
    out = stft_module_forward(x, n_fft, hop_length, win_length,
                              center=True, normalized=False, mode='real_imag',
                              frame_tile=8)
    out = jax.block_until_ready(out)
    ref = _reference_jnp(x, n_fft, hop_length, win_length)
    np.testing.assert_allclose(np.asarray(out), np.asarray(ref), rtol=1e-4, atol=1e-4)
    assert out.shape == (B, 2, 1 + L // hop_length, n_fft // 2 + 1)   # (2, 2, 17, 9)

    # Config 2: hop does not divide n_fft -> tiled-matmul fallback path.
    B2, L2 = 2, 60
    n_fft2, hop2, win2 = 16, 6, 16
    x2 = jax.random.normal(jax.random.PRNGKey(0), (B2, L2), dtype=jnp.float32)
    out2 = stft_module_forward(x2, n_fft2, hop2, win2,
                               center=True, normalized=False, mode='real_imag',
                               frame_tile=8)
    out2 = jax.block_until_ready(out2)
    ref2 = _reference_jnp(x2, n_fft2, hop2, win2)
    np.testing.assert_allclose(np.asarray(out2), np.asarray(ref2), rtol=1e-4, atol=1e-4)

    print("KERNEL_OK")
</pallas_src>

<mosaic_0001>
module attributes {stable_mosaic.version = 11 : i64} {
  func.func @_stft_chunk_kernel(%arg0: i32, %arg1: i32, %arg2: memref<64x4xf32, #tpu.memory_space<any>>, %arg3: memref<4x4x256xf32, #tpu.memory_space<vmem>>, %arg4: memref<1x8x256xf32, #tpu.memory_space<vmem>>, %arg5: memref<11x4xf32, #tpu.memory_space<vmem>>, %arg6: memref<1x!tpu.dma_semaphore, #tpu.memory_space<semaphore_mem>>) attributes {dimension_semantics = [#tpu.dimension_semantics<parallel>, #tpu.dimension_semantics<parallel>], iteration_bounds = array<i64: 2, 3>, scalar_prefetch = 0 : i64, scratch_operands = 2 : i64, tpu.core_type = #tpu.core_type<tc>, window_params = [{}, {pipeline_mode = #tpu.pipeline_mode<synchronous>, transform_indices = @transform_1, window_bounds = array<i64: 4, 4, 256>}, {transform_indices = @transform_2, window_bounds = array<i64: 1, 8, 256>}]} {
    %c32_i32 = arith.constant 32 : i32
    %0 = arith.muli %arg0, %c32_i32 : i32
    %c8_i32 = arith.constant 8 : i32
    %1 = arith.muli %arg1, %c8_i32 : i32
    %2 = arith.addi %0, %1 : i32
    %c0_i32 = arith.constant 0 : i32
    %c0_i32_0 = arith.constant 0 : i32
    %3 = tpu.memref_slice %arg2[%2, %c0_i32_0] : memref<64x4xf32, #tpu.memory_space<any>> -> memref<11x4xf32, #tpu.memory_space<any>>
    %4 = tpu.memref_slice %arg6[%c0_i32] : memref<1x!tpu.dma_semaphore, #tpu.memory_space<semaphore_mem>> -> memref<1x!tpu.dma_semaphore, #tpu.memory_space<semaphore_mem>>
    %5 = tpu.memref_squeeze %4 : memref<1x!tpu.dma_semaphore, #tpu.memory_space<semaphore_mem>> -> memref<!tpu.dma_semaphore, #tpu.memory_space<semaphore_mem>>
    tpu.enqueue_dma source(%3 : memref<11x4xf32, #tpu.memory_space<any>>) target(%arg5 : memref<11x4xf32, #tpu.memory_space<vmem>>) target_semaphore(%5 : memref<!tpu.dma_semaphore, #tpu.memory_space<semaphore_mem>>)
    %c0_i32_1 = arith.constant 0 : i32
    %c0_i32_2 = arith.constant 0 : i32
    %6 = tpu.memref_slice %arg2[%2, %c0_i32_2] : memref<64x4xf32, #tpu.memory_space<any>> -> memref<11x4xf32, #tpu.memory_space<any>>
    %7 = tpu.memref_slice %arg6[%c0_i32_1] : memref<1x!tpu.dma_semaphore, #tpu.memory_space<semaphore_mem>> -> memref<1x!tpu.dma_semaphore, #tpu.memory_space<semaphore_mem>>
    %8 = tpu.memref_squeeze %7 : memref<1x!tpu.dma_semaphore, #tpu.memory_space<semaphore_mem>> -> memref<!tpu.dma_semaphore, #tpu.memory_space<semaphore_mem>>
    tpu.wait_dma2 semaphore(%8 : memref<!tpu.dma_semaphore, #tpu.memory_space<semaphore_mem>>) src(%6 : memref<11x4xf32, #tpu.memory_space<any>>) dst(%arg5 : memref<11x4xf32, #tpu.memory_space<vmem>>)
    %c0 = arith.constant 0 : index
    %c0_3 = arith.constant 0 : index
    %9 = vector.load %arg5[%c0, %c0_3] : memref<11x4xf32, #tpu.memory_space<vmem>>, vector<11x4xf32>
    %cst = arith.constant 0.000000e+00 : f32
    %10 = vector.broadcast %cst : f32 to vector<8x256xf32>
    %11 = vector.extract_strided_slice %9 {offsets = [0, 0], sizes = [8, 4], strides = [1, 1]} : vector<11x4xf32> to vector<8x4xf32>
    %c0_4 = arith.constant 0 : index
    %c0_5 = arith.constant 0 : index
    %c0_6 = arith.constant 0 : index
    %12 = vector.load %arg3[%c0_4, %c0_5, %c0_6] : memref<4x4x256xf32, #tpu.memory_space<vmem>>, vector<1x4x256xf32>
    %13 = vector.shape_cast %12 : vector<1x4x256xf32> to vector<4x256xf32>
    %cst_7 = arith.constant dense<0.000000e+00> : vector<8x256xf32>
    %14 = tpu.matmul %11, %13, %cst_7 {dimension_numbers = #tpu.dot_dimension_numbers<[1], [0], [0], [1], [0, 0, 1, 1], [], []>} : vector<8x4xf32>, vector<4x256xf32>, vector<8x256xf32> -> vector<8x256xf32>
    %15 = arith.addf %10, %14 : vector<8x256xf32>
    %16 = vector.extract_strided_slice %9 {offsets = [1, 0], sizes = [8, 4], strides = [1, 1]} : vector<11x4xf32> to vector<8x4xf32>
    %c1 = arith.constant 1 : index
    %c0_8 = arith.constant 0 : index
    %c0_9 = arith.constant 0 : index
    %17 = vector.load %arg3[%c1, %c0_8, %c0_9] : memref<4x4x256xf32, #tpu.memory_space<vmem>>, vector<1x4x256xf32>
    %18 = vector.shape_cast %17 : vector<1x4x256xf32> to vector<4x256xf32>
    %cst_10 = arith.constant dense<0.000000e+00> : vector<8x256xf32>
    %19 = tpu.matmul %16, %18, %cst_10 {dimension_numbers = #tpu.dot_dimension_numbers<[1], [0], [0], [1], [0, 0, 1, 1], [], []>} : vector<8x4xf32>, vector<4x256xf32>, vector<8x256xf32> -> vector<8x256xf32>
    %20 = arith.addf %15, %19 : vector<8x256xf32>
    %21 = vector.extract_strided_slice %9 {offsets = [2, 0], sizes = [8, 4], strides = [1, 1]} : vector<11x4xf32> to vector<8x4xf32>
    %c2 = arith.constant 2 : index
    %c0_11 = arith.constant 0 : index
    %c0_12 = arith.constant 0 : index
    %22 = vector.load %arg3[%c2, %c0_11, %c0_12] : memref<4x4x256xf32, #tpu.memory_space<vmem>>, vector<1x4x256xf32>
    %23 = vector.shape_cast %22 : vector<1x4x256xf32> to vector<4x256xf32>
    %cst_13 = arith.constant dense<0.000000e+00> : vector<8x256xf32>
    %24 = tpu.matmul %21, %23, %cst_13 {dimension_numbers = #tpu.dot_dimension_numbers<[1], [0], [0], [1], [0, 0, 1, 1], [], []>} : vector<8x4xf32>, vector<4x256xf32>, vector<8x256xf32> -> vector<8x256xf32>
    %25 = arith.addf %20, %24 : vector<8x256xf32>
    %26 = vector.extract_strided_slice %9 {offsets = [3, 0], sizes = [8, 4], strides = [1, 1]} : vector<11x4xf32> to vector<8x4xf32>
    %c3 = arith.constant 3 : index
    %c0_14 = arith.constant 0 : index
    %c0_15 = arith.constant 0 : index
    %27 = vector.load %arg3[%c3, %c0_14, %c0_15] : memref<4x4x256xf32, #tpu.memory_space<vmem>>, vector<1x4x256xf32>
    %28 = vector.shape_cast %27 : vector<1x4x256xf32> to vector<4x256xf32>
    %cst_16 = arith.constant dense<0.000000e+00> : vector<8x256xf32>
    %29 = tpu.matmul %26, %28, %cst_16 {dimension_numbers = #tpu.dot_dimension_numbers<[1], [0], [0], [1], [0, 0, 1, 1], [], []>} : vector<8x4xf32>, vector<4x256xf32>, vector<8x256xf32> -> vector<8x256xf32>
    %30 = arith.addf %25, %29 : vector<8x256xf32>
    %c0_17 = arith.constant 0 : index
    %c0_18 = arith.constant 0 : index
    %c0_19 = arith.constant 0 : index
    %31 = vector.load %arg4[%c0_17, %c0_18, %c0_19] : memref<1x8x256xf32, #tpu.memory_space<vmem>>, vector<1x8x256xf32>
    %32 = vector.shape_cast %31 : vector<1x8x256xf32> to vector<8x256xf32>
    %33 = vector.shape_cast %30 : vector<8x256xf32> to vector<1x8x256xf32>
    tpu.vector_store %arg4[%c0_17, %c0_18, %c0_19], %33 {strides = array<i32>} : memref<1x8x256xf32, #tpu.memory_space<vmem>>, vector<1x8x256xf32>,
    return
  }
  func.func @transform_1(%arg0: i32, %arg1: i32) -> (i32, i32, i32) {
    %c0_i32 = arith.constant 0 : i32
    %c0_i32_0 = arith.constant 0 : i32
    %c0_i32_1 = arith.constant 0 : i32
    %c0_i32_2 = arith.constant 0 : i32
    return %c0_i32, %c0_i32_0, %c0_i32_1 : i32, i32, i32
  }
  func.func @transform_2(%arg0: i32, %arg1: i32) -> (i32, i32, i32) {
    %c0_i32 = arith.constant 0 : i32
    %c0_i32_0 = arith.constant 0 : i32
    return %arg0, %arg1, %c0_i32 : i32, i32, i32
  }
}

</mosaic_0001>

<llo_original>
// kernel: tpu_custom_call.1
$region0: #{tpu_custom_call.1}
  #allocation0 [shape = 'u32[]', space=smem, size = 0x4, offset = 0x4, fixed_abs, tag = 'smem constant byte address 0x4 - core index']
  #allocation1 [shape = 'u32[72,128]{1,0:T(1,128)}', space=vmem, size = 0x9000, scoped, tag = 'internal scratch']
  #allocation2 [shape = 'f32[11,4]{1,0:T(8,128)}', space=vmem, size = 0x2000, scoped, tag = 'scratch operand']
  #allocation3 [shape = 's32[1]{0}', space=sflag, size = 0x4, scoped, tag = 'scratch operand']
  #allocation6 [shape = 's32[]', space=sflag, size = 0x4, offset = 0, fixed_abs, tag = 'sflag constant byte address 0x0 - dummy sync flag']
  %s0 = inlined_call_operand.vmem [shape: f32[64,4], index: 0, kind: input, shape index: {}]
  %s1 = inlined_call_operand.vmem [shape: f32[4,4,256], index: 1, kind: input, shape index: {}]
  %s2 = inlined_call_operand.hbm [shape: f32[2,24,256], index: 2, kind: output, shape index: {}]
  %s3 = sld [smem:[#allocation0]]
  $region59: #{tpu_custom_call.1} parent=0
    _
  %s5 = ssub.s32 1, %s3
  %s6 = scalar_select 0, %s5, %s3
  $region1: #{tpu_custom_call.1} parent=0
    #allocation4 [shape = 'u8[16384]{0}', space=vmem, size = 0x4000, scoped, tag = 'output window, operand 0']
    #allocation5 [shape = 's32[2]{0}', space=sflag, size = 0x8, scoped, tag = 'scoped memory for tpu_custom_call.1']
    %7 = vsyncpa [#allocation5], 0
    %s8 = scalar_lea.sflag [#allocation5], 1
    %9 = vsyncpa %s8, 0
    loop: start=0, step=1, limit=8
    $region2: #{tpu_custom_call.1} parent=1 // loop_pre_header
      _
    $region3: #{tpu_custom_call.1} parent=1 // loop_header
      %s11 = sphi 0, %s15
      %p12 = scmp.ge.s32.totalorder %s11, 8
      %s18 = sphi 0, %s30
      %s19 = sphi 0, %s26
      %s20 = sphi 0, %s18
      %s21 = sphi 0, %s19
      %s22 = sphi 0, %s20
      %s23 = sphi 0, %s21
      %s31 = sphi 0, %s31
      %s33 = sphi 0, %s31
      %s34 = sphi 0, %s33
      %s48 = sphi 0, %s34
      %s56 = sphi 0, %s58
      %s59 = sphi 0, %s56
      %s60 = sphi 0, %s59
      %s76 = sphi 0, %s60
    $region4: #{tpu_custom_call.1} parent=1 // loop_header_branch
      %14 = sbr.rel (%p12) target = $region8
    $region5: #{tpu_custom_call.1} parent=1 // loop_body
      %s16 = ssub.s32 %s11, 1
      %s17 = ssub.s32 %s11, 2
      %s24 = sadd.s32 1, %s19
      %p25 = scmp.ge.s32.totalorder %s24, 3
      %s26 = scalar_select %p25, 0, %s24
      %s27 = sadd.s32 1, %s18
      %s28 = scalar_select %p25, %s27, %s18
      %p29 = scmp.ge.s32.totalorder %s28, 2
      %s30 = scalar_select %p29, 0, %s28
      %s32 = sadd.s32 %s31, 1
      %p35 = scmp.eq.s32.totalorder %s11, 5
      %p36 = scmp.ne.s32.totalorder %s31, %s33
      %p37 = scmp.eq.s32.totalorder %s11, 0
      %p38 = por %p36, %p37
      %p39 = scmp.ne.s32.totalorder %s31, %s33
      %p40 = scmp.eq.s32.totalorder %s16, 5
      %p41 = por %p39, %p40
      %p42 = scmp.ne.s32.totalorder %s33, %s34
      %p43 = scmp.eq.s32.totalorder %s16, 0
      %p44 = por %p42, %p43
      %p45 = scmp.ne.s32.totalorder %s33, %s34
      %p46 = scmp.eq.s32.totalorder %s17, 5
      %p47 = por %p45, %p46
      %p49 = scmp.ne.s32.totalorder %s34, %s48
      %p50 = scmp.eq.s32.totalorder %s17, 0
      %p51 = por %p49, %p50
      %s52 = ssub.s32 %s18, %s30
      %s53 = ssub.s32 %s19, %s26
      %s54 = sor.u32 %s52, %s53
      %p55 = scmp.eq.s32.totalorder %s54, 0
      %s57 = sadd.s32 %s56, 1
      %s58 = scalar_select %p55, %s56, %s57
      %p61 = pneg %p55
      %p62 = scmp.eq.s32.totalorder %s11, 5
      %p63 = por %p61, %p62
      %p64 = scmp.ne.s32.totalorder %s56, %s59
      %p65 = scmp.eq.s32.totalorder %s11, 0
      %p66 = por %p64, %p65
      %p67 = scmp.ne.s32.totalorder %s56, %s59
      %p68 = scmp.eq.s32.totalorder %s16, 5
      %p69 = por %p67, %p68
      %p70 = scmp.ne.s32.totalorder %s59, %s60
      %p71 = scmp.eq.s32.totalorder %s16, 0
      %p72 = por %p70, %p71
      %p73 = scmp.ne.s32.totalorder %s59, %s60
      %p74 = scmp.eq.s32.totalorder %s17, 5
      %p75 = por %p73, %p74
      %p77 = scmp.ne.s32.totalorder %s60, %s76
      %p78 = scmp.eq.s32.totalorder %s17, 0
      %p79 = por %p77, %p78
      %p80 = scmp.le.s32.totalorder 1, %s11
      %p81 = scmp.lt.s32.totalorder %s11, 7
      %p82 = pnand %p80, %p81
      %p83 = pneg %p82
      // Predicated region
      $region9: #{tpu_custom_call.1} parent=5 // pred_check
        _
      $region10: #{tpu_custom_call.1} parent=5 // pred_check_branch
        %85 = sbr.rel (%p82) target = $region12
      $region11: #{tpu_custom_call.1} parent=5 // pred_region
        %s86 = ssub.s32 %s11, 1
        // Predicated region
        $region13: #{tpu_custom_call.1} parent=11 // pred_check
          %p87 = pneg %p44
        $region14: #{tpu_custom_call.1} parent=11 // pred_check_branch
          %89 = sbr.rel (%p87) target = $region16
        $region15: #{tpu_custom_call.1} parent=11 // pred_region
          _
        $region16: #{tpu_custom_call.1} parent=11 // pred_fallthru
          _
      $region12: #{tpu_custom_call.1} parent=5 // pred_fallthru
        _
      %p90 = scmp.lt.s32.totalorder %s11, 6
      // Predicated region
      $region17: #{tpu_custom_call.1} parent=5 // pred_check
        %p91 = pneg %p90
      $region18: #{tpu_custom_call.1} parent=5 // pred_check_branch
        %93 = sbr.rel (%p91) target = $region20
      $region19: #{tpu_custom_call.1} parent=5 // pred_region
        _
      $region20: #{tpu_custom_call.1} parent=5 // pred_fallthru
        _
      %p94 = scmp.le.s32.totalorder 1, %s11
      %p95 = scmp.lt.s32.totalorder %s11, 7
      %p96 = pnand %p94, %p95
      %p97 = pneg %p96
      // Predicated region
      $region21: #{tpu_custom_call.1} parent=5 // pred_check
        _
      $region22: #{tpu_custom_call.1} parent=5 // pred_check_branch
        %99 = sbr.rel (%p96) target = $region24
      $region23: #{tpu_custom_call.1} parent=5 // pred_region
        %s100 = ssub.s32 %s11, 1
        %p101 = pneg %p44
        %p102 = pneg %p41
        %p103 = pneg %p72
        %p104 = pneg %p69
        %s105 = sand.u32 %s59, 1
        %s106 = scalar_lea.sflag [#allocation5], %s105
        %s107 = sand.u32 %s59, 1
        %s108 = smul.addr %s107, 16
        %s109 = scalar_lea.vmem [#allocation4], %s108
        %s110 = smul.u32 %s20, 32
        %s111 = smul.u32 %s21, 8
        %s112 = sadd.s32 %s110, %s111
        %s113 = scalar_lea.vmem %s0, %s112
        // Predicated region
        $region25: #{tpu_custom_call.1} parent=23 // pred_check
          _
        $region26: #{tpu_custom_call.1} parent=23 // pred_check_branch
          %115 = sbr.rel (0) target = $region28
        $region27: #{tpu_custom_call.1} parent=23 // pred_region
          %s116 = scalar_lea.vmem %s113, 8
          %s117 = scalar_lea.vmem [#allocation2], 8
          loop: start=0, step=1, limit=1
          $region29: #{tpu_custom_call.1} parent=27 // loop_pre_header
            _
          $region30: #{tpu_custom_call.1} parent=27 // loop_header
            %s119 = sphi 0, %s123
            %p120 = scmp.ge.s32.totalorder %s119, 1
            %s124 = sphi %s113, %s113
            %s125 = sphi [#allocation2], [#allocation2]
          $region31: #{tpu_custom_call.1} parent=27 // loop_header_branch
            %122 = sbr.rel (%p120) target = $region35
          $region32: #{tpu_custom_call.1} parent=27 // loop_body
            %v126 = vld [vmem:[%s124] sm:$0xff]
            %127 = vst [vmem:[%s125] sm:$0xff] %v126
          $region33: #{tpu_custom_call.1} parent=27 // loop_footer
            %s123 = sadd.s32 1, %s119
          $region34: #{tpu_custom_call.1} parent=27 // loop_footer_branch
            %118 = sbr.rel target = $region30
          $region35: #{tpu_custom_call.1} parent=27 // loop_exit
            _
          %s129 = ssub.s32 8, 1
          loop: start=0, step=1, limit=1
          $region36: #{tpu_custom_call.1} parent=27 // loop_pre_header
            _
          $region37: #{tpu_custom_call.1} parent=27 // loop_header
            %s131 = sphi 0, %s135
            %p132 = scmp.ge.s32.totalorder %s131, 1
            %s136 = sphi %s116, %s116
            %s137 = sphi %s117, %s117
          $region38: #{tpu_custom_call.1} parent=27 // loop_header_branch
            %134 = sbr.rel (%p132) target = $region42
          $region39: #{tpu_custom_call.1} parent=27 // loop_body
            %v138 = vld [vmem:[%s136] sm:%s129]
            %139 = vst [vmem:[%s137] sm:%s129] %v138
          $region40: #{tpu_custom_call.1} parent=27 // loop_footer
            %s135 = sadd.s32 1, %s131
          $region41: #{tpu_custom_call.1} parent=27 // loop_footer_branch
            %130 = sbr.rel target = $region37
          $region42: #{tpu_custom_call.1} parent=27 // loop_exit
            _
        $region28: #{tpu_custom_call.1} parent=23 // pred_fallthru
          _
        // Predicated region
        $region43: #{tpu_custom_call.1} parent=23 // pred_check
          _
        $region44: #{tpu_custom_call.1} parent=23 // pred_check_branch
          %142 = sbr.rel (0) target = $region46
        $region45: #{tpu_custom_call.1} parent=23 // pred_region
          %143 = vsyncadd [#allocation3], 176
        $region46: #{tpu_custom_call.1} parent=23 // pred_fallthru
          _
        %s144 = smul.u32 11, 1
        %s145 = sshll.u32 %s144, 4
        %146 = dma.done [#allocation3], %s145
        %v147 = vld [vmem:[#allocation2] sm:$0xff]
        %v148 = vld [vmem:[#allocation2 + $0x8] sm:$0x7]
        %v149 = vld [vmem:[%s1] sm:$0xff]
        %s150 = scalar_lea.vmem %s1, 8
        %v151 = vld [vmem:[%s150] sm:$0xff]
        %vm154 = vcmask 1046528
        %v155 = vrot.slane %v147, 1
        %v156 = vrot.slane %v148, 1
        %v157 = vsel %vm154, %v155, %v156
        %159 = vst [vmem:[#allocation1] ss:$2 sm:$0xff] %v151
        %v160 = vld.sshfl [vmem:[#allocation1] sm:$0xff pattern:$0x75316420]
        %v161 = vld.sshfl [vmem:[#allocation1 + $0x8] sm:$0xff pattern:$0x75316420]
        %vm162 = vcmask 31744
        %v163 = vsel %vm162, %v157, 0
        %vm165 = vcmask 1043456
        %v166 = vsel %vm165, %v160, 0
        %v168 = vsel %vm165, %v161, 0
        %170 = vmatpush.msra.mxu0 0.0
        %171 = vmatpush.msra.mxu0 0.0
        %172 = vmatpush.msra.mxu0 0.0
        %173 = vmatpush.msra.mxu0 0.0
        %174 = vmatpush.msra.mxu0 0.0
        %175 = vmatpush.msra.mxu0 0.0
        %176 = vmatpush.msra.mxu0 0.0
        %177 = vmatpush.msra.mxu0 0.0
        %178 = vmatpush.msra.mxu0 0.0
        %179 = vmatpush.msra.mxu0 0.0
        %180 = vmatpush.msra.mxu0 0.0
        %181 = vmatpush.msra.mxu0 0.0
        %182 = vmatpush.msra.mxu0 0.0
        %183 = vmatpush.msra.mxu0 0.0
        %184 = vmatpush.msra.mxu0 0.0
        %185 = vmatpush.msra.mxu0 %v166
        %186 = vmatmul.f32.gmra.mxu0 %v163
        %v187 = vpop.f32.mrf.mxu0
        %v188 = vadd.f32 0.0, %v187
        %189 = vdwg.mxu0
        %190 = vmatpush.msra.mxu0 0.0
        %191 = vmatpush.msra.mxu0 0.0
        %192 = vmatpush.msra.mxu0 0.0
        %193 = vmatpush.msra.mxu0 0.0
        %194 = vmatpush.msra.mxu0 0.0
        %195 = vmatpush.msra.mxu0 0.0
        %196 = vmatpush.msra.mxu0 0.0
        %197 = vmatpush.msra.mxu0 0.0
        %198 = vmatpush.msra.mxu0 0.0
        %199 = vmatpush.msra.mxu0 0.0
        %200 = vmatpush.msra.mxu0 0.0
        %201 = vmatpush.msra.mxu0 0.0
        %202 = vmatpush.msra.mxu0 0.0
        %203 = vmatpush.msra.mxu0 0.0
        %204 = vmatpush.msra.mxu0 0.0
        %205 = vmatpush.msra.mxu0 %v168
        %206 = vmatmul.f32.gmra.mxu0 %v163
        %v207 = vpop.f32.mrf.mxu0
        %v208 = vadd.f32 0.0, %v207
        %209 = vdwg.mxu0
        %211 = vst [vmem:[#allocation1] ss:$2 sm:$0xff] %v149
        %v212 = vld.sshfl [vmem:[#allocation1] sm:$0xff pattern:$0x75316420]
        %v213 = vld.sshfl [vmem:[#allocation1 + $0x8] sm:$0xff pattern:$0x75316420]
        %v214 = vsel %vm162, %v147, 0
        %v216 = vsel %vm165, %v212, 0
        %v218 = vsel %vm165, %v213, 0
        %220 = vmatpush.msra.mxu0 0.0
        %221 = vmatpush.msra.mxu0 0.0
        %222 = vmatpush.msra.mxu0 0.0
        %223 = vmatpush.msra.mxu0 0.0
        %224 = vmatpush.msra.mxu0 0.0
        %225 = vmatpush.msra.mxu0 0.0
        %226 = vmatpush.msra.mxu0 0.0
        %227 = vmatpush.msra.mxu0 0.0
        %228 = vmatpush.msra.mxu0 0.0
        %229 = vmatpush.msra.mxu0 0.0
        %230 = vmatpush.msra.mxu0 0.0
        %231 = vmatpush.msra.mxu0 0.0
        %232 = vmatpush.msra.mxu0 0.0
        %233 = vmatpush.msra.mxu0 0.0
        %234 = vmatpush.msra.mxu0 0.0
        %235 = vmatpush.msra.mxu0 %v216
        %236 = vmatmul.f32.gmra.mxu0 %v214
        %v237 = vpop.f32.mrf.mxu0
        %v238 = vadd.f32 %v188, %v237
        %239 = vdwg.mxu0
        %240 = vmatpush.msra.mxu0 0.0
        %241 = vmatpush.msra.mxu0 0.0
        %242 = vmatpush.msra.mxu0 0.0
        %243 = vmatpush.msra.mxu0 0.0
        %244 = vmatpush.msra.mxu0 0.0
        %245 = vmatpush.msra.mxu0 0.0
        %246 = vmatpush.msra.mxu0 0.0
        %247 = vmatpush.msra.mxu0 0.0
        %248 = vmatpush.msra.mxu0 0.0
        %249 = vmatpush.msra.mxu0 0.0
        %250 = vmatpush.msra.mxu0 0.0
        %251 = vmatpush.msra.mxu0 0.0
        %252 = vmatpush.msra.mxu0 0.0
        %253 = vmatpush.msra.mxu0 0.0
        %254 = vmatpush.msra.mxu0 0.0
        %255 = vmatpush.msra.mxu0 %v218
        %256 = vmatmul.f32.gmra.mxu0 %v214
        %v257 = vpop.f32.mrf.mxu0
        %v258 = vadd.f32 %v208, %v257
        %259 = vdwg.mxu0
        %s260 = scalar_lea.vmem %s1, 16
        %v261 = vld [vmem:[%s260] sm:$0xff]
        %vm262 = vcmask 1045504
        %v263 = vrot.slane %v147, 2
        %v264 = vrot.slane %v148, 2
        %v265 = vsel %vm262, %v263, %v264
        %267 = vst [vmem:[#allocation1] ss:$2 sm:$0xff] %v261
        %v268 = vld.sshfl [vmem:[#allocation1] sm:$0xff pattern:$0x75316420]
        %v269 = vld.sshfl [vmem:[#allocation1 + $0x8] sm:$0xff pattern:$0x75316420]
        %v270 = vsel %vm162, %v265, 0
        %v272 = vsel %vm165, %v268, 0
        %v274 = vsel %vm165, %v269, 0
        %276 = vmatpush.msra.mxu0 0.0
        %277 = vmatpush.msra.mxu0 0.0
        %278 = vmatpush.msra.mxu0 0.0
        %279 = vmatpush.msra.mxu0 0.0
        %280 = vmatpush.msra.mxu0 0.0
        %281 = vmatpush.msra.mxu0 0.0
        %282 = vmatpush.msra.mxu0 0.0
        %283 = vmatpush.msra.mxu0 0.0
        %284 = vmatpush.msra.mxu0 0.0
        %285 = vmatpush.msra.mxu0 0.0
        %286 = vmatpush.msra.mxu0 0.0
        %287 = vmatpush.msra.mxu0 0.0
        %288 = vmatpush.msra.mxu0 0.0
        %289 = vmatpush.msra.mxu0 0.0
        %290 = vmatpush.msra.mxu0 0.0
        %291 = vmatpush.msra.mxu0 %v272
        %292 = vmatmul.f32.gmra.mxu0 %v270
        %v293 = vpop.f32.mrf.mxu0
        %v294 = vadd.f32 0.0, %v293
        %295 = vdwg.mxu0
        %296 = vmatpush.msra.mxu0 0.0
        %297 = vmatpush.msra.mxu0 0.0
        %298 = vmatpush.msra.mxu0 0.0
        %299 = vmatpush.msra.mxu0 0.0
        %300 = vmatpush.msra.mxu0 0.0
        %301 = vmatpush.msra.mxu0 0.0
        %302 = vmatpush.msra.mxu0 0.0
        %303 = vmatpush.msra.mxu0 0.0
        %304 = vmatpush.msra.mxu0 0.0
        %305 = vmatpush.msra.mxu0 0.0
        %306 = vmatpush.msra.mxu0 0.0
        %307 = vmatpush.msra.mxu0 0.0
        %308 = vmatpush.msra.mxu0 0.0
        %309 = vmatpush.msra.mxu0 0.0
        %310 = vmatpush.msra.mxu0 0.0
        %311 = vmatpush.msra.mxu0 %v274
        %312 = vmatmul.f32.gmra.mxu0 %v270
        %v313 = vpop.f32.mrf.mxu0
        %v314 = vadd.f32 0.0, %v313
        %315 = vdwg.mxu0
        %v316 = vadd.f32 %v238, %v294
        %v317 = vadd.f32 %v258, %v314
        %s318 = scalar_lea.vmem %s1, 24
        %v319 = vld [vmem:[%s318] sm:$0xff]
        %vm320 = vcmask 1044480
        %v321 = vrot.slane %v147, 3
        %v322 = vrot.slane %v148, 3
        %v323 = vsel %vm320, %v321, %v322
        %325 = vst [vmem:[#allocation1] ss:$2 sm:$0xff] %v319
        %v326 = vld.sshfl [vmem:[#allocation1] sm:$0xff pattern:$0x75316420]
        %v327 = vld.sshfl [vmem:[#allocation1 + $0x8] sm:$0xff pattern:$0x75316420]
        %v328 = vsel %vm162, %v323, 0
        %v330 = vsel %vm165, %v326, 0
        %v332 = vsel %vm165, %v327, 0
        %334 = vmatpush.msra.mxu0 0.0
        %335 = vmatpush.msra.mxu0 0.0
        %336 = vmatpush.msra.mxu0 0.0
        %337 = vmatpush.msra.mxu0 0.0
        %338 = vmatpush.msra.mxu0 0.0
        %339 = vmatpush.msra.mxu0 0.0
        %340 = vmatpush.msra.mxu0 0.0
        %341 = vmatpush.msra.mxu0 0.0
        %342 = vmatpush.msra.mxu0 0.0
        %343 = vmatpush.msra.mxu0 0.0
        %344 = vmatpush.msra.mxu0 0.0
        %345 = vmatpush.msra.mxu0 0.0
        %346 = vmatpush.msra.mxu0 0.0
        %347 = vmatpush.msra.mxu0 0.0
        %348 = vmatpush.msra.mxu0 0.0
        %349 = vmatpush.msra.mxu0 %v330
        %350 = vmatmul.f32.gmra.mxu0 %v328
        %v351 = vpop.f32.mrf.mxu0
        %v352 = vadd.f32 0.0, %v351
        %353 = vdwg.mxu0
        %354 = vmatpush.msra.mxu0 0.0
        %355 = vmatpush.msra.mxu0 0.0
        %356 = vmatpush.msra.mxu0 0.0
        %357 = vmatpush.msra.mxu0 0.0
        %358 = vmatpush.msra.mxu0 0.0
        %359 = vmatpush.msra.mxu0 0.0
        %360 = vmatpush.msra.mxu0 0.0
        %361 = vmatpush.msra.mxu0 0.0
        %362 = vmatpush.msra.mxu0 0.0
        %363 = vmatpush.msra.mxu0 0.0
        %364 = vmatpush.msra.mxu0 0.0
        %365 = vmatpush.msra.mxu0 0.0
        %366 = vmatpush.msra.mxu0 0.0
        %367 = vmatpush.msra.mxu0 0.0
        %368 = vmatpush.msra.mxu0 0.0
        %369 = vmatpush.msra.mxu0 %v332
        %370 = vmatmul.f32.gmra.mxu0 %v328
        %v371 = vpop.f32.mrf.mxu0
        %v372 = vadd.f32 0.0, %v371
        %373 = vdwg.mxu0
        %v374 = vadd.f32 %v316, %v352
        %v375 = vadd.f32 %v317, %v372
        %376 = vst [vmem:[%s109] sm:$0xff] %v374
        %377 = vst [vmem:[%s109 + $0x8] sm:$0xff] %v375
        %s378 = sand.u32 %s59, 1
        %s379 = scalar_lea.sflag [#allocation5], %s378
        %s380 = sand.u32 %s59, 1
        %s381 = smul.addr %s380, 16
        %s382 = scalar_lea.vmem [#allocation4], %s381
        // Predicated region
        $region47: #{tpu_custom_call.1} parent=23 // pred_check
          %p383 = pneg %p69
        $region48: #{tpu_custom_call.1} parent=23 // pred_check_branch
          %385 = sbr.rel (%p383) target = $region50
        $region49: #{tpu_custom_call.1} parent=23 // pred_region
          %387 = vsyncadd %s379, 0
          %s388 = smul.addr %s21, 2
          %s389 = smul.addr %s20, 6
          %s390 = sadd.s32 %s388, %s389
          %s391 = smul.addr %s390, 8
          %s392 = scalar_lea.hbm %s2, %s391
          %s394 = sshll.u32 %s382, 4
          %s395 = int_to_ptr.vmem [resolvable:$true] %s394
          %s396 = sshll.u32 %s392, 4
          %s397 = int_to_ptr.hbm [resolvable:$true] %s396
          %399 = dma.vmem_to_hbm [thread:$0]  %s395, 256, %s397, %s379
        $region50: #{tpu_custom_call.1} parent=23 // pred_fallthru
          _
      $region24: #{tpu_custom_call.1} parent=5 // pred_fallthru
        _
      %p400 = scmp.le.s32.totalorder 2, %s11
      // Predicated region
      $region51: #{tpu_custom_call.1} parent=5 // pred_check
        %p401 = pneg %p400
      $region52: #{tpu_custom_call.1} parent=5 // pred_check_branch
        %403 = sbr.rel (%p401) target = $region54
      $region53: #{tpu_custom_call.1} parent=5 // pred_region
        %s404 = ssub.s32 %s11, 2
        // Predicated region
        $region55: #{tpu_custom_call.1} parent=53 // pred_check
          %p405 = pneg %p75
        $region56: #{tpu_custom_call.1} parent=53 // pred_check_branch
          %407 = sbr.rel (%p405) target = $region58
        $region57: #{tpu_custom_call.1} parent=53 // pred_region
          %s408 = sand.u32 %s60, 1
          %s409 = scalar_lea.sflag [#allocation5], %s408
          %s410 = sand.u32 %s60, 1
          %s411 = smul.addr %s410, 16
          %s412 = scalar_lea.vmem [#allocation4], %s411
          %414 = dma.done %s409, 256
        $region58: #{tpu_custom_call.1} parent=53 // pred_fallthru
          _
      $region54: #{tpu_custom_call.1} parent=5 // pred_fallthru
        _
    $region6: #{tpu_custom_call.1} parent=1 // loop_footer
      %s15 = sadd.s32 1, %s11
    $region7: #{tpu_custom_call.1} parent=1 // loop_footer_branch
      %10 = sbr.rel target = $region3
    $region8: #{tpu_custom_call.1} parent=1 // loop_exit
      _
    %415 = vsyncpa [#allocation5], 1
    %s416 = scalar_lea.sflag [#allocation5], 1
    %417 = vsyncpa %s416, 1
  %418 = vsyncmov [#allocation3]
  %s419 = vpop.sfrf %418
  %p420 = scmp.eq.s32.totalorder %s419, 0
  %p421 = pneg %p420
  %423 = shalt.err (%p421)

</llo_original>
